<compile_context>
chip_gen: v7x
topology: tpu7x:2x2x1
jax: 0.10.0
libtpu: 0.0.40
codegen_flags: <defaults>
</compile_context>

<pallas_src>
import math
import functools

import jax
import jax.numpy as jnp
from jax.experimental import pallas as pl
from jax.experimental.pallas import tpu as pltpu


# ------------------------------ tiling helper ------------------------------ #
def _pick_tile(m, candidates=(512, 256, 128, 64, 32, 16, 8)):
    for t in candidates:
        if m % t == 0:
            return t
    return m  # block equal to the full dim is always legal


# ------------------------- fused QKV projection kernel ------------------------- #
def _qkv_proj_kernel(x_ref, w_ref, b_ref, q_ref, k_ref, v_ref):
    # x: (tm, K) bf16; w: (K, 3D) bf16 (Q columns pre-scaled by 1/sqrt(d_k)); b: (1, 3D) f32
    acc = jnp.dot(x_ref[...], w_ref[...], preferred_element_type=jnp.float32) + b_ref[...]
    D = q_ref.shape[-1]
    q_ref[...] = acc[:, :D].astype(q_ref.dtype)
    k_ref[...] = acc[:, D:2 * D].astype(k_ref.dtype)
    v_ref[...] = acc[:, 2 * D:].astype(v_ref.dtype)


def fused_qkv_projection(x2d, w_qkv, b_qkv, out_dtype=jnp.bfloat16):
    """q, k, v = split(x2d @ w_qkv + b_qkv, 3, axis=-1), one activation read."""
    M, K = x2d.shape
    threeD = w_qkv.shape[1]
    D = threeD // 3
    tm = _pick_tile(M)
    return pl.pallas_call(
        _qkv_proj_kernel,
        out_shape=tuple(jax.ShapeDtypeStruct((M, D), out_dtype) for _ in range(3)),
        grid=(M // tm,),
        in_specs=[
            pl.BlockSpec((tm, K), lambda i: (i, 0)),
            pl.BlockSpec((K, threeD), lambda i: (0, 0)),
            pl.BlockSpec((1, threeD), lambda i: (0, 0)),
        ],
        out_specs=tuple(pl.BlockSpec((tm, D), lambda i: (i, 0)) for _ in range(3)),
        compiler_params=pltpu.CompilerParams(dimension_semantics=("parallel",)),
    )(x2d.astype(jnp.bfloat16), w_qkv.astype(jnp.bfloat16),
      b_qkv.reshape(1, threeD).astype(jnp.float32))


# ------------------------------ generic linear ------------------------------ #
def _linear_kernel(x_ref, w_ref, b_ref, o_ref):
    o_ref[...] = (jnp.dot(x_ref[...], w_ref[...], preferred_element_type=jnp.float32)
                  + b_ref[...]).astype(o_ref.dtype)


def fused_linear(x2d, wt, b, out_dtype=jnp.float32):
    """y = x2d @ wt + b.  x2d: (M, K); wt: (K, N) (= torch weight .T); b: (N,)."""
    M, K = x2d.shape
    _, N = wt.shape
    tm = _pick_tile(M)
    return pl.pallas_call(
        _linear_kernel,
        out_shape=jax.ShapeDtypeStruct((M, N), out_dtype),
        grid=(M // tm,),
        in_specs=[
            pl.BlockSpec((tm, K), lambda i: (i, 0)),
            pl.BlockSpec((K, N), lambda i: (0, 0)),
            pl.BlockSpec((1, N), lambda i: (0, 0)),
        ],
        out_specs=pl.BlockSpec((tm, N), lambda i: (i, 0)),
        compiler_params=pltpu.CompilerParams(dimension_semantics=("parallel",)),
    )(x2d.astype(jnp.bfloat16), wt.astype(jnp.bfloat16),
      b.reshape(1, N).astype(jnp.float32))


# ----------------------------- attention kernel ----------------------------- #
def _attention_kernel(q_ref, k_ref, v_ref, bias_ref, wo_ref, bo_ref, o_ref, *, h, d_k):
    # q_ref:   (1, tq, D) bf16  -- Q already scaled by 1/sqrt(d_k)
    # k_ref:   (1, S,  D) bf16  -- resident across query tiles of this batch
    # v_ref:   (1, S,  D) bf16
    # bias_ref:(1, tq, S) bf16  -- additive bias (posr; masked positions = -1e9)
    # wo_ref:  (D, D)     bf16  -- output-projection weight (already transposed)
    # bo_ref:  (1, D)     f32
    # o_ref:   (1, tq, D) f32   -- final module output (output projection fused)
    bias = bias_ref[0].astype(jnp.float32)                    # (tq, S)
    ctx = []
    for head in range(h):                                     # h is small (4..16)
        off = head * d_k
        q = q_ref[0, :, pl.ds(off, d_k)]                      # (tq, d_k) bf16
        k = k_ref[0, :, pl.ds(off, d_k)]                      # (S,  d_k) bf16
        v = v_ref[0, :, pl.ds(off, d_k)]                      # (S,  d_k) bf16

        # q @ k.T without materializing a transpose (contract on d_k), f32 acc.
        s = jax.lax.dot_general(q, k, (((1,), (1,)), ((), ())),
                                preferred_element_type=jnp.float32)   # (tq, S)
        s = s + bias

        # numerically-stable softmax over keys (kept in f32; v5e-safe)
        m = jnp.max(s, axis=-1, keepdims=True)
        e = jnp.exp(s - m)
        p = e * pl.reciprocal(jnp.sum(e, axis=-1, keepdims=True), approx=True)

        ctx.append(jnp.dot(p.astype(jnp.bfloat16), v,
                           preferred_element_type=jnp.float32))       # (tq, d_k)

    x = jnp.concatenate(ctx, axis=-1).astype(jnp.bfloat16)            # (tq, D)
    # Fused output projection + single lane-dense store.
    o_ref[0, :, :] = (jnp.dot(x, wo_ref[...], preferred_element_type=jnp.float32)
                      + bo_ref[...])


def packed_head_attention(q, k, v, bias, wo_t, bo, h, d_k, tq=None):
    """q/k/v: (B, S, D) bf16; bias: (B, S, S); wo_t: (D, D); bo: (1, D).
    Returns the full MHA output (B, S, D) f32 (output projection included)."""
    B, S, D = q.shape
    if tq is None:
        tq = _pick_tile(S, candidates=(256, 128, 64, 32, 16, 8))
    kern = functools.partial(_attention_kernel, h=h, d_k=d_k)
    return pl.pallas_call(
        kern,
        out_shape=jax.ShapeDtypeStruct((B, S, D), jnp.float32),
        grid=(B, S // tq),
        in_specs=[
            pl.BlockSpec((1, tq, D), lambda b, i: (b, i, 0)),
            pl.BlockSpec((1, S, D), lambda b, i: (b, 0, 0)),
            pl.BlockSpec((1, S, D), lambda b, i: (b, 0, 0)),
            pl.BlockSpec((1, tq, S), lambda b, i: (b, i, 0)),
            pl.BlockSpec((D, D), lambda b, i: (0, 0)),
            pl.BlockSpec((1, D), lambda b, i: (0, 0)),
        ],
        out_specs=pl.BlockSpec((1, tq, D), lambda b, i: (b, i, 0)),
        compiler_params=pltpu.CompilerParams(
            dimension_semantics=("parallel", "parallel")),
    )(q, k, v, bias, wo_t, bo)


# ----------------------- mask / posr -> additive bias ----------------------- #
def _build_attention_bias(B, S, mask, trg_tri_mask, posr, dtype=jnp.bfloat16):
    keep = None
    if mask is not None:
        keep = (mask != 0)
    if trg_tri_mask is not None:
        t = (trg_tri_mask != 0)
        keep = t if keep is None else jnp.logical_and(keep, t)
    if posr is not None:
        bias = jnp.broadcast_to(posr.astype(jnp.float32), (B, S, S))
    else:
        bias = jnp.zeros((B, S, S), jnp.float32)
    if keep is not None:
        # Mask AFTER adding posr (matches the reference masked_fill order exactly).
        bias = jnp.where(jnp.broadcast_to(keep, (B, S, S)), bias,
                         jnp.float32(-1000000000.0))
    return bias.astype(dtype)


# --------------------------- MultiHeadedAttention --------------------------- #
def multi_headed_attention(params, query, key, value,
                           mask=None, trg_tri_mask=None, posr=None):
    """Forward pass identical to the PyTorch module (eval-mode dropout).
    Assumes query/key/value share the (B, S, d_model) shape (as the module uses)."""
    B, S, D = query.shape
    h = params["h"]
    d_k = D // h
    scale = 1.0 / math.sqrt(d_k)

    wq, wk, wv, wo = params["w"]
    bq, bk, bv, bo = params["b"]

    if (query is key) and (key is value):
        # Self-attention fast path: single fused (B*S, D) @ (D, 3D) projection,
        # 1/sqrt(d_k) folded into the Q columns; q/k/v emitted as separate outputs.
        w_qkv = jnp.concatenate([wq.T * scale, wk.T, wv.T], axis=1)   # (D, 3D)
        b_qkv = jnp.concatenate([bq * scale, bk, bv], axis=0)         # (3D,)
        q2, k2, v2 = fused_qkv_projection(query.reshape(B * S, D), w_qkv, b_qkv)
    else:
        # Distinct q/k/v sources (cross-attention): three M-tiled projections,
        # written directly to separate arrays (no concat round trip).
        q2 = fused_linear(query.reshape(B * S, D), wq.T * scale, bq * scale, jnp.bfloat16)
        k2 = fused_linear(key.reshape(B * S, D), wk.T, bk, jnp.bfloat16)
        v2 = fused_linear(value.reshape(B * S, D), wv.T, bv, jnp.bfloat16)

    q3 = q2.reshape(B, S, D)
    k3 = k2.reshape(B, S, D)
    v3 = v2.reshape(B, S, D)

    bias = _build_attention_bias(B, S, mask, trg_tri_mask, posr)       # (B, S, S) bf16

    wo_t = wo.T.astype(jnp.bfloat16)
    bo2 = bo.reshape(1, D).astype(jnp.float32)

    # Attention + fused output projection -> final (B, S, D) f32 output.
    return packed_head_attention(q3, k3, v3, bias, wo_t, bo2, h, d_k)


# ---------------------------- Pure-JAX reference ---------------------------- #
def _reference(params, query, key, value, mask=None, trg_tri_mask=None, posr=None):
    B, S, D = query.shape
    h = params["h"]
    d_k = D // h

    def lin(i, x):
        return x @ params["w"][i].T + params["b"][i]

    q = lin(0, query).reshape(B, S, h, d_k).transpose(0, 2, 1, 3)
    k = lin(1, key).reshape(B, S, h, d_k).transpose(0, 2, 1, 3)
    v = lin(2, value).reshape(B, S, h, d_k).transpose(0, 2, 1, 3)
    scores = jnp.einsum("bhqd,bhkd->bhqk", q, k) / math.sqrt(d_k)
    if posr is not None:
        scores = scores + posr[:, None]
    if mask is not None:
        scores = jnp.where(mask[:, None] == 0, -1e9, scores)
    if trg_tri_mask is not None:
        scores = jnp.where(trg_tri_mask[:, None] == 0, -1e9, scores)
    p = jax.nn.softmax(scores, axis=-1)
    x = jnp.einsum("bhqk,bhkd->bhqd", p, v)
    x = x.transpose(0, 2, 1, 3).reshape(B, S, D)
    return lin(3, x)


if __name__ == "__main__":
    B, S, d_model, h = 2, 8, 32, 4
    rng = jax.random.PRNGKey(0)
    ks = jax.random.split(rng, 12)

    # Deterministic synthetic parameters: 4 linears (d_model, d_model) + biases.
    w = [0.1 * jax.random.normal(ks[i], (d_model, d_model), jnp.float32) for i in range(4)]
    b = [0.05 * jax.random.normal(ks[4 + i], (d_model,), jnp.float32) for i in range(4)]
    params = {"w": w, "b": b, "h": h}

    query = jax.random.normal(ks[8], (B, S, d_model), jnp.float32)
    key_in = jax.random.normal(ks[9], (B, S, d_model), jnp.float32)
    value = jax.random.normal(ks[10], (B, S, d_model), jnp.float32)

    # Padding-style mask (last 2 keys of batch 1 masked), causal trg_tri_mask, posr bias.
    mask = jnp.ones((B, S, S), jnp.float32).at[1, :, -2:].set(0.0)
    tri = jnp.tril(jnp.ones((1, S, S), jnp.float32))
    posr = 0.1 * jax.random.normal(ks[11], (B, S, S), jnp.float32)

    # Tolerance loosened for bf16 MXU operands (f32 accumulation) + approx reciprocal.
    TOL = 5e-2

    # 1) Self-attention call (fused-QKV fast path).
    out_self = multi_headed_attention(params, query, query, query,
                                      mask=mask, trg_tri_mask=tri, posr=posr)
    out_self = jax.block_until_ready(out_self)
    ref_self = _reference(params, query, query, query,
                          mask=mask, trg_tri_mask=tri, posr=posr)
    assert out_self.shape == (B, S, d_model)
    err_self = float(jnp.max(jnp.abs(out_self - ref_self)))
    assert err_self < TOL, err_self

    # 2) Distinct q/k/v call (separate-projection path).
    out_x = multi_headed_attention(params, query, key_in, value, mask=mask, posr=posr)
    out_x = jax.block_until_ready(out_x)
    ref_x = _reference(params, query, key_in, value, mask=mask, posr=posr)
    err_x = float(jnp.max(jnp.abs(out_x - ref_x)))
    assert err_x < TOL, err_x

    print("KERNEL_OK")
</pallas_src>

<mosaic_0001>
module attributes {stable_mosaic.version = 11 : i64} {
  func.func @_qkv_proj_kernel(%arg0: i32, %arg1: memref<16x32xbf16, #tpu.memory_space<vmem>>, %arg2: memref<32x96xbf16, #tpu.memory_space<vmem>>, %arg3: memref<1x96xf32, #tpu.memory_space<vmem>>, %arg4: memref<16x32xbf16, #tpu.memory_space<vmem>>, %arg5: memref<16x32xbf16, #tpu.memory_space<vmem>>, %arg6: memref<16x32xbf16, #tpu.memory_space<vmem>>) attributes {dimension_semantics = [#tpu.dimension_semantics<parallel>], iteration_bounds = array<i64: 1>, scalar_prefetch = 0 : i64, scratch_operands = 0 : i64, tpu.core_type = #tpu.core_type<tc>, window_params = [{transform_indices = @transform_0, window_bounds = array<i64: 16, 32>}, {pipeline_mode = #tpu.pipeline_mode<synchronous>, transform_indices = @transform_1, window_bounds = array<i64: 32, 96>}, {pipeline_mode = #tpu.pipeline_mode<synchronous>, transform_indices = @transform_2, window_bounds = array<i64: 1, 96>}, {transform_indices = @transform_3, window_bounds = array<i64: 16, 32>}, {transform_indices = @transform_4, window_bounds = array<i64: 16, 32>}, {transform_indices = @transform_5, window_bounds = array<i64: 16, 32>}]} {
    %c0 = arith.constant 0 : index
    %c0_0 = arith.constant 0 : index
    %0 = vector.load %arg1[%c0, %c0_0] : memref<16x32xbf16, #tpu.memory_space<vmem>>, vector<16x32xbf16>
    %c0_1 = arith.constant 0 : index
    %c0_2 = arith.constant 0 : index
    %1 = vector.load %arg2[%c0_1, %c0_2] : memref<32x96xbf16, #tpu.memory_space<vmem>>, vector<32x96xbf16>
    %cst = arith.constant dense<0.000000e+00> : vector<16x96xf32>
    %2 = tpu.matmul %0, %1, %cst {dimension_numbers = #tpu.dot_dimension_numbers<[1], [0], [0], [1], [0, 0, 1, 1], [], []>} : vector<16x32xbf16>, vector<32x96xbf16>, vector<16x96xf32> -> vector<16x96xf32>
    %c0_3 = arith.constant 0 : index
    %c0_4 = arith.constant 0 : index
    %3 = vector.load %arg3[%c0_3, %c0_4] : memref<1x96xf32, #tpu.memory_space<vmem>>, vector<1x96xf32>
    %4 = vector.broadcast %3 : vector<1x96xf32> to vector<16x96xf32>
    %5 = arith.addf %2, %4 : vector<16x96xf32>
    %6 = vector.extract_strided_slice %5 {offsets = [0, 0], sizes = [16, 32], strides = [1, 1]} : vector<16x96xf32> to vector<16x32xf32>
    %7 = arith.truncf %6 : vector<16x32xf32> to vector<16x32xbf16>
    %c0_5 = arith.constant 0 : index
    %c0_6 = arith.constant 0 : index
    %8 = vector.load %arg4[%c0_5, %c0_6] : memref<16x32xbf16, #tpu.memory_space<vmem>>, vector<16x32xbf16>
    tpu.vector_store %arg4[%c0_5, %c0_6], %7 {strides = array<i32>} : memref<16x32xbf16, #tpu.memory_space<vmem>>, vector<16x32xbf16>,
    %9 = vector.extract_strided_slice %5 {offsets = [0, 32], sizes = [16, 32], strides = [1, 1]} : vector<16x96xf32> to vector<16x32xf32>
    %10 = arith.truncf %9 : vector<16x32xf32> to vector<16x32xbf16>
    %c0_7 = arith.constant 0 : index
    %c0_8 = arith.constant 0 : index
    %11 = vector.load %arg5[%c0_7, %c0_8] : memref<16x32xbf16, #tpu.memory_space<vmem>>, vector<16x32xbf16>
    tpu.vector_store %arg5[%c0_7, %c0_8], %10 {strides = array<i32>} : memref<16x32xbf16, #tpu.memory_space<vmem>>, vector<16x32xbf16>,
    %12 = vector.extract_strided_slice %5 {offsets = [0, 64], sizes = [16, 32], strides = [1, 1]} : vector<16x96xf32> to vector<16x32xf32>
    %13 = arith.truncf %12 : vector<16x32xf32> to vector<16x32xbf16>
    %c0_9 = arith.constant 0 : index
    %c0_10 = arith.constant 0 : index
    %14 = vector.load %arg6[%c0_9, %c0_10] : memref<16x32xbf16, #tpu.memory_space<vmem>>, vector<16x32xbf16>
    tpu.vector_store %arg6[%c0_9, %c0_10], %13 {strides = array<i32>} : memref<16x32xbf16, #tpu.memory_space<vmem>>, vector<16x32xbf16>,
    return
  }
  func.func @transform_0(%arg0: i32) -> (i32, i32) {
    %c0_i32 = arith.constant 0 : i32
    %c0_i32_0 = arith.constant 0 : i32
    return %arg0, %c0_i32 : i32, i32
  }
  func.func @transform_1(%arg0: i32) -> (i32, i32) {
    %c0_i32 = arith.constant 0 : i32
    %c0_i32_0 = arith.constant 0 : i32
    %c0_i32_1 = arith.constant 0 : i32
    return %c0_i32, %c0_i32_0 : i32, i32
  }
  func.func @transform_2(%arg0: i32) -> (i32, i32) {
    %c0_i32 = arith.constant 0 : i32
    %c0_i32_0 = arith.constant 0 : i32
    %c0_i32_1 = arith.constant 0 : i32
    return %c0_i32, %c0_i32_0 : i32, i32
  }
  func.func @transform_3(%arg0: i32) -> (i32, i32) {
    %c0_i32 = arith.constant 0 : i32
    %c0_i32_0 = arith.constant 0 : i32
    return %arg0, %c0_i32 : i32, i32
  }
  func.func @transform_4(%arg0: i32) -> (i32, i32) {
    %c0_i32 = arith.constant 0 : i32
    %c0_i32_0 = arith.constant 0 : i32
    return %arg0, %c0_i32 : i32, i32
  }
  func.func @transform_5(%arg0: i32) -> (i32, i32) {
    %c0_i32 = arith.constant 0 : i32
    %c0_i32_0 = arith.constant 0 : i32
    return %arg0, %c0_i32 : i32, i32
  }
}

</mosaic_0001>

<llo_original>
// kernel: tpu_custom_call.1
$region0: #{tpu_custom_call.1}
  #allocation0 [shape = 'u32[]', space=smem, size = 0x4, offset = 0x4, fixed_abs, tag = 'smem constant byte address 0x4 - core index']
  #allocation1 [shape = 'u32[144,128]{1,0:T(1,128)}', space=vmem, size = 0x12000, scoped, tag = 'internal scratch']
  %s0 = inlined_call_operand.hbm [shape: bf16[16,32], index: 0, kind: input, shape index: {}]
  %s1 = inlined_call_operand.hbm [shape: bf16[32,96], index: 1, kind: input, shape index: {}]
  %s2 = inlined_call_operand.vmem [shape: f32[1,96], index: 2, kind: input, shape index: {}]
  %s3 = inlined_call_operand.hbm [shape: bf16[16,32], index: 3, kind: output, shape index: {0}]
  %s4 = inlined_call_operand.hbm [shape: bf16[16,32], index: 4, kind: output, shape index: {1}]
  %s5 = inlined_call_operand.hbm [shape: bf16[16,32], index: 5, kind: output, shape index: {2}]
  %6 = xla_tuple %s3, %s4, %s5
  %s7 = sld [smem:[#allocation0]]
  $region46: #{tpu_custom_call.1} parent=0
    _
  %s9 = ssub.s32 1, %s7
  %s10 = scalar_select 0, %s9, %s7
  $region1: #{tpu_custom_call.1} parent=0
    #allocation2 [shape = 'u8[4096]{0}', space=vmem, size = 0x1000, scoped, tag = 'input window, operand 0, single buffered']
    #allocation3 [shape = 's32[1]{0}', space=sflag, size = 0x4, scoped, tag = 'scoped memory for tpu_custom_call.1']
    #allocation4 [shape = 's32[1]{0}', space=sflag, size = 0x4, scoped, tag = 'scoped memory for tpu_custom_call.1']
    #allocation5 [shape = 'u8[8192]{0}', space=vmem, size = 0x2000, scoped, tag = 'input window, operand 1, single buffered']
    #allocation6 [shape = 's32[1]{0}', space=sflag, size = 0x4, scoped, tag = 'scoped memory for tpu_custom_call.1']
    #allocation7 [shape = 'u8[4096]{0}', space=vmem, size = 0x1000, scoped, tag = 'output window, operand 0, single buffered']
    #allocation8 [shape = 'u8[4096]{0}', space=vmem, size = 0x1000, scoped, tag = 'output window, operand 1, single buffered']
    #allocation9 [shape = 's32[1]{0}', space=sflag, size = 0x4, scoped, tag = 'scoped memory for tpu_custom_call.1']
    #allocation10 [shape = 'u8[4096]{0}', space=vmem, size = 0x1000, scoped, tag = 'output window, operand 2, single buffered']
    %11 = vsyncpa [#allocation3], 0
    %12 = vsyncpa [#allocation6], 0
    %13 = vsyncpa [#allocation4], 0
    %14 = vsyncpa [#allocation9], 0
    // Predicated region
    $region2: #{tpu_custom_call.1} parent=1 // pred_check
      _
    $region3: #{tpu_custom_call.1} parent=1 // pred_check_branch
      %16 = sbr.rel (0) target = $region5
    $region4: #{tpu_custom_call.1} parent=1 // pred_region
      %s18 = ssub.s32 128, 128
      %19 = vsyncadd [#allocation3], %s18
      %s20 = sshll.u32 [#allocation2], 4
      %s21 = int_to_ptr.vmem [resolvable:$true] %s20
      %26 = dma.hbm_to_vmem [thread:$0]  %s0, 128, %s21, [#allocation3], 64, 64, 4
    $region5: #{tpu_custom_call.1} parent=1 // pred_fallthru
      _
    // Predicated region
    $region6: #{tpu_custom_call.1} parent=1 // pred_check
      _
    $region7: #{tpu_custom_call.1} parent=1 // pred_check_branch
      %28 = sbr.rel (0) target = $region9
    $region8: #{tpu_custom_call.1} parent=1 // pred_region
      %s30 = ssub.s32 256, 256
      %31 = vsyncadd [#allocation6], %s30
      %s32 = sshll.u32 [#allocation5], 4
      %s33 = int_to_ptr.vmem [resolvable:$true] %s32
      %38 = dma.hbm_to_vmem [thread:$0]  %s1, 256, %s33, [#allocation6], 64, 64, 4
    $region9: #{tpu_custom_call.1} parent=1 // pred_fallthru
      _
    // Predicated region
    $region10: #{tpu_custom_call.1} parent=1 // pred_check
      _
    $region11: #{tpu_custom_call.1} parent=1 // pred_check_branch
      %40 = sbr.rel (0) target = $region13
    $region12: #{tpu_custom_call.1} parent=1 // pred_region
      _
    $region13: #{tpu_custom_call.1} parent=1 // pred_fallthru
      _
    // Predicated region
    $region14: #{tpu_custom_call.1} parent=1 // pred_check
      _
    $region15: #{tpu_custom_call.1} parent=1 // pred_check_branch
      %42 = sbr.rel (0) target = $region17
    $region16: #{tpu_custom_call.1} parent=1 // pred_region
      %43 = dma.done [#allocation3], 128
    $region17: #{tpu_custom_call.1} parent=1 // pred_fallthru
      _
    // Predicated region
    $region18: #{tpu_custom_call.1} parent=1 // pred_check
      _
    $region19: #{tpu_custom_call.1} parent=1 // pred_check_branch
      %45 = sbr.rel (0) target = $region21
    $region20: #{tpu_custom_call.1} parent=1 // pred_region
      %46 = dma.done [#allocation6], 256
    $region21: #{tpu_custom_call.1} parent=1 // pred_fallthru
      _
    %v48 = vld [vmem:[#allocation2] sm:$0xf]
    %v49 = vld [vmem:[#allocation2 + $0x4] sm:$0xf]
    %v50 = vld [vmem:[#allocation5] sm:$0xf]
    %v51 = vld [vmem:[#allocation5 + $0x4] sm:$0xf]
    %v52 = vld [vmem:[#allocation5 + $0x8] sm:$0xf]
    %v53 = vld [vmem:[#allocation5 + $0xc] sm:$0xf]
    %v54 = vld [vmem:[%s2] sm:$0x1]
    %v56 = vlaneseq
    %v57 = vshrl.u32 %v56, 7
    %v58 = vsub.s32 0, %v57
    %v59 = vrot.slane %v54, %v58
    %v63 = vunpack.c.l.b16 %v48
    %v64 = vunpack.c.l.b16 %v49
    %v65 = vpack.c.b16 %v64, %v63
    %v70 = vunpack.c.l.b16 %v50
    %v71 = vunpack.c.l.b16 %v51
    %v72 = vunpack.c.l.b16 %v52
    %v73 = vunpack.c.l.b16 %v53
    %v74 = vpack.c.b16 %v71, %v70
    %v75 = vpack.c.b16 %v73, %v72
    %vm78 = vcmask 261120
    %v80 = vsel %vm78, %v65, 0
    %82 = vmatprep.subr.bf16.mxu0 0
    %83 = vmatpush1.bf16.msra.mxu0 %v74
    %84 = vmatprep.subr.bf16.mxu0 0
    %85 = vmatpush1.bf16.msra.mxu0 %v75
    %86 = vmatprep.subr.bf16.mxu0 0
    %87 = vmatpush1.bf16.msra.mxu0 0
    %88 = vmatprep.subr.bf16.mxu0 0
    %89 = vmatpush1.bf16.msra.mxu0 0
    %90 = vmatprep.subr.bf16.mxu0 0
    %91 = vmatpush1.bf16.msra.mxu0 0
    %92 = vmatprep.subr.bf16.mxu0 0
    %93 = vmatpush1.bf16.msra.mxu0 0
    %94 = vmatprep.subr.bf16.mxu0 0
    %95 = vmatpush1.bf16.msra.mxu0 0
    %96 = vmatprep.subr.bf16.mxu0 0
    %97 = vmatpush1.bf16.msra.mxu0 0
    %98 = vmatprep.subr.bf16.mxu0 0
    %99 = vmatpush1.bf16.msra.mxu0 0
    %100 = vmatprep.subr.bf16.mxu0 0
    %101 = vmatpush1.bf16.msra.mxu0 0
    %102 = vmatprep.subr.bf16.mxu0 0
    %103 = vmatpush1.bf16.msra.mxu0 0
    %104 = vmatprep.subr.bf16.mxu0 0
    %105 = vmatpush1.bf16.msra.mxu0 0
    %106 = vmatprep.subr.bf16.mxu0 0
    %107 = vmatpush1.bf16.msra.mxu0 0
    %108 = vmatprep.subr.bf16.mxu0 0
    %109 = vmatpush1.bf16.msra.mxu0 0
    %110 = vmatprep.subr.bf16.mxu0 0
    %111 = vmatpush1.bf16.msra.mxu0 0
    %112 = vmatprep.subr.bf16.mxu0 0
    %113 = vmatpush1.bf16.msra.mxu0 0
    %114 = vmatprep.mubr.bf16.mxu0 0
    %115 = vmatmul.mubr.bf16.gmra.mrb[0].mxu0 %v80
    %v116 = vpop.f32.mrb[0].mxu0
    %v117 = vadd.f32 %v59, %v116
    %v118 = vpop.f32.mrb[0].mxu0
    %v119 = vpop.f32.mrb[0].mxu0
    %v120 = vadd.f32 %v59, %v119
    %v121 = vpop.f32.mrb[0].mxu0
    %122 = vdwg.mxu0
    %v123 = vpack.c.bf16 %v120, %v117
    %v125 = vunpack.c.l.b16 %v123
    %v126 = vunpack.c.h.b16 %v123
    %v127 = vpack.c.b16 %v125, %v125
    %v128 = vpack.c.b16 %v126, %v126
    %vm131 = vcmask 257024
    %132 = vst.msk [vmem:[#allocation7] sm:$0xf] %vm131, %v127
    %133 = vst.msk [vmem:[#allocation7 + $0x4] sm:$0xf] %vm131, %v128
    %134 = vrot.lane.b32.xlu0 %v127, 96
    %v135 = vpop.permute.xlu0 %134
    %136 = vrot.lane.b32.xlu0 %v128, 96
    %v137 = vpop.permute.xlu0 %136
    %140 = vst.msk [vmem:[#allocation8] sm:$0xf] %vm131, %v135
    %141 = vst.msk [vmem:[#allocation8 + $0x4] sm:$0xf] %vm131, %v137
    %142 = vrot.lane.b32.xlu0 %v127, 64
    %v143 = vpop.permute.xlu0 %142
    %144 = vrot.lane.b32.xlu0 %v128, 64
    %v145 = vpop.permute.xlu0 %144
    %148 = vst.msk [vmem:[#allocation10] sm:$0xf] %vm131, %v143
    %149 = vst.msk [vmem:[#allocation10 + $0x4] sm:$0xf] %vm131, %v145
    // Predicated region
    $region22: #{tpu_custom_call.1} parent=1 // pred_check
      _
    $region23: #{tpu_custom_call.1} parent=1 // pred_check_branch
      %151 = sbr.rel (0) target = $region25
    $region24: #{tpu_custom_call.1} parent=1 // pred_region
      %s153 = ssub.s32 128, 128
      %154 = vsyncadd [#allocation4], %s153
      %s155 = sshll.u32 [#allocation7], 4
      %s156 = int_to_ptr.vmem [resolvable:$true] %s155
      %161 = dma.vmem_to_hbm [thread:$0]  %s156, 128, %s3, [#allocation4], 64, 64, 4
    $region25: #{tpu_custom_call.1} parent=1 // pred_fallthru
      _
    // Predicated region
    $region26: #{tpu_custom_call.1} parent=1 // pred_check
      _
    $region27: #{tpu_custom_call.1} parent=1 // pred_check_branch
      %163 = sbr.rel (0) target = $region29
    $region28: #{tpu_custom_call.1} parent=1 // pred_region
      %s165 = ssub.s32 128, 128
      %166 = vsyncadd [#allocation9], %s165
      %s167 = sshll.u32 [#allocation8], 4
      %s168 = int_to_ptr.vmem [resolvable:$true] %s167
      %173 = dma.vmem_to_hbm [thread:$0]  %s168, 128, %s4, [#allocation9], 64, 64, 4
    $region29: #{tpu_custom_call.1} parent=1 // pred_fallthru
      _
    // Predicated region
    $region30: #{tpu_custom_call.1} parent=1 // pred_check
      _
    $region31: #{tpu_custom_call.1} parent=1 // pred_check_branch
      %175 = sbr.rel (0) target = $region33
    $region32: #{tpu_custom_call.1} parent=1 // pred_region
      %s177 = ssub.s32 128, 128
      %178 = vsyncadd [#allocation9], %s177
      %s179 = sshll.u32 [#allocation10], 4
      %s180 = int_to_ptr.vmem [resolvable:$true] %s179
      %185 = dma.vmem_to_hbm [thread:$0]  %s180, 128, %s5, [#allocation9], 64, 64, 4
    $region33: #{tpu_custom_call.1} parent=1 // pred_fallthru
      _
    // Predicated region
    $region34: #{tpu_custom_call.1} parent=1 // pred_check
      _
    $region35: #{tpu_custom_call.1} parent=1 // pred_check_branch
      %187 = sbr.rel (0) target = $region37
    $region36: #{tpu_custom_call.1} parent=1 // pred_region
      %188 = dma.done [#allocation4], 128
    $region37: #{tpu_custom_call.1} parent=1 // pred_fallthru
      _
    // Predicated region
    $region38: #{tpu_custom_call.1} parent=1 // pred_check
      _
    $region39: #{tpu_custom_call.1} parent=1 // pred_check_branch
      %190 = sbr.rel (0) target = $region41
    $region40: #{tpu_custom_call.1} parent=1 // pred_region
      %191 = dma.done [#allocation9], 128
    $region41: #{tpu_custom_call.1} parent=1 // pred_fallthru
      _
    // Predicated region
    $region42: #{tpu_custom_call.1} parent=1 // pred_check
      _
    $region43: #{tpu_custom_call.1} parent=1 // pred_check_branch
      %193 = sbr.rel (0) target = $region45
    $region44: #{tpu_custom_call.1} parent=1 // pred_region
      %194 = dma.done [#allocation9], 128
    $region45: #{tpu_custom_call.1} parent=1 // pred_fallthru
      _
    %195 = vsyncpa [#allocation3], 1
    %196 = vsyncpa [#allocation6], 1
    %197 = vsyncpa [#allocation4], 1
    %198 = vsyncpa [#allocation9], 1

</llo_original>
